<compile_context>
chip_gen: v5e
topology: v5e:2x2
jax: 0.10.0
libtpu: 0.0.40
codegen_flags: <defaults>
</compile_context>

<pallas_src>
import math

import jax
import jax.numpy as jnp
from jax.experimental import pallas as pl
from jax.experimental.pallas import tpu as pltpu


def _round_up(x, m):
    return -(-x // m) * m


def _make_kernel(p, normalize):
    """p = lane-packing factor (number of original rows per packed row)."""

    def kernel_plain(beliefs_ref, pots_ref, qw_ref, b_ref, o_ref):
        # x = beliefs * pots (upcast in-kernel; v5e has no bf16 VALU)     VPU
        x = beliefs_ref[...].astype(jnp.float32) * pots_ref[...].astype(jnp.float32)
        # one skinny matmul against block-diagonal [q | w^T]              MXU
        y = jnp.dot(x, qw_ref[...], preferred_element_type=jnp.float32)
        s = y[:, :p]                                     # x_j . q  per sub-row
        o_ref[...] = -(s * s) + y[:, p:2 * p] + b_ref[0]

    def kernel_norm(beliefs_ref, pots_ref, qw_ref, seg_ref, b_ref, o_ref):
        pots = pots_ref[...].astype(jnp.float32)
        # Fused segmented softmax.  Row-max stabilization: the row max is
        # constant within every segment, so softmax is unchanged (differs from
        # per-segment max only in extreme-underflow corner cases).
        m = jnp.max(pots, axis=-1, keepdims=True)                         # XLU
        e = jnp.exp(pots - m)                                             # EUP
        # per-segment sums broadcast to every lane via 0/1 same-segment matrix
        ssum = jnp.dot(e, seg_ref[...], preferred_element_type=jnp.float32)  # MXU
        pots = e / ssum
        x = beliefs_ref[...].astype(jnp.float32) * pots                   # VPU
        y = jnp.dot(x, qw_ref[...], preferred_element_type=jnp.float32)   # MXU
        s = y[:, :p]
        o_ref[...] = -(s * s) + y[:, p:2 * p] + b_ref[0]

    return kernel_norm if normalize else kernel_plain


_TARGET_TILE_BYTES = 2 * 1024 * 1024   # per input, per pipeline buffer


def t_model_v3_forward(beliefs, pots, quad_part, lin_w, lin_b, *,
                       num_nodes, num_vals, num_pairs, normalize_pots=False):
    """TModelV3 forward. beliefs/pots: (B, D) f32 or bf16; quad_part: (D, 1);
    lin_w: (1, D); lin_b: (1,). Returns (B,) f32."""
    B, D = beliefs.shape
    assert pots.shape == (B, D)
    f32 = jnp.float32
    quad_part = quad_part.astype(f32)
    lin_w = lin_w.astype(f32)
    lin_b = lin_b.astype(f32)
    assert quad_part.shape == (D, 1)
    assert lin_w.shape == (1, D), "expected nn.Linear(D, 1) weight of shape (1, D)"
    assert lin_b.shape == (1,)

    # ---- lane packing: view (B, D) as (B/p, p*D) so the last dim is 128-dense.
    p = 128 // math.gcd(D, 128)
    if B % p != 0:
        p = 1                          # fall back rather than pad (no extra HBM pass)
    rows, lp = B // p, p * D
    beliefs_v = beliefs.reshape(rows, lp)        # zero-cost row-major view
    pots_v = pots.reshape(rows, lp)

    # Fused projection [q | w^T], replicated block-diagonally for the packing.
    eye_p = jnp.eye(p, dtype=f32)
    qw = jnp.concatenate([jnp.kron(eye_p, quad_part),        # (lp, p)
                          jnp.kron(eye_p, lin_w.T)], axis=1)  # (lp, 2p)
    b1 = lin_b.reshape(1)                                     # SMEM scalar

    # ---- batch tiling: big tiles (amortize grid-step overhead), no padding,
    #      and >=2 tiles whenever possible so v7x's two TCs both get work.
    itemsize = jnp.dtype(beliefs.dtype).itemsize
    tb_cap = max(8, (_TARGET_TILE_BYTES // (lp * itemsize)) // 8 * 8)
    if rows <= 8:
        tb = rows                                  # single (possibly tiny) tile
    else:
        tb = min(tb_cap, _round_up(-(-rows // 2), 8))
    num_tiles = pl.cdiv(rows, tb)

    in_specs = [
        pl.BlockSpec((tb, lp), lambda i: (i, 0)),             # beliefs tile
        pl.BlockSpec((tb, lp), lambda i: (i, 0)),             # pots tile
        pl.BlockSpec((lp, 2 * p), lambda i: (0, 0)),          # [q|w] (resident)
    ]
    inputs = [beliefs_v, pots_v, qw]

    flops = B * D + 4 * B * D * p + 3 * B
    transc = 0
    bytes_accessed = beliefs_v.nbytes + pots_v.nbytes + B * 4 + qw.nbytes

    if normalize_pots:
        num_unary = num_nodes * num_vals
        assert D == num_unary + num_vals * num_vals * num_pairs
        seg_ids = []
        for i in range(D):
            if i < num_unary:
                seg_ids.append(i // num_vals)
            else:
                seg_ids.append(num_nodes + (i - num_unary) // (num_vals * num_vals))
        seg_ids = jnp.array(seg_ids, dtype=jnp.int32)
        s_d = (seg_ids[:, None] == seg_ids[None, :]).astype(f32)    # (D, D)
        seg = jnp.kron(eye_p, s_d)                                   # (lp, lp)
        in_specs.append(pl.BlockSpec((lp, lp), lambda i: (0, 0)))    # resident
        inputs.append(seg)
        flops += 2 * rows * lp * lp + 2 * B * D
        transc += 2 * B * D
        bytes_accessed += seg.nbytes

    in_specs.append(pl.BlockSpec(memory_space=pltpu.MemorySpace.SMEM))  # bias
    inputs.append(b1)

    cost = pl.CostEstimate(flops=int(flops), transcendentals=int(transc),
                           bytes_accessed=int(bytes_accessed))

    out = pl.pallas_call(
        _make_kernel(p, normalize_pots),
        out_shape=jax.ShapeDtypeStruct((rows, p), f32),
        grid=(num_tiles,),
        in_specs=in_specs,
        out_specs=pl.BlockSpec((tb, p), lambda i: (i, 0)),
        compiler_params=pltpu.CompilerParams(
            dimension_semantics=("parallel",)),     # v7x: batch split across TCs
        cost_estimate=cost,
    )(*inputs)

    # Matches torch .squeeze() for B > 1 (for B == 1 torch returns a 0-d scalar).
    return out.reshape(B)


if __name__ == "__main__":
    key = jax.random.PRNGKey(0)

    # Shapes consistent with the module:
    #   num_nodes=4, num_vals=4, pairs=[(0,1)]  ->  D = 4*4 + 4*4*1 = 32.
    num_nodes, num_vals = 4, 4
    pairs = [(0, 1)]
    num_pairs = len(pairs)
    num_unary = num_nodes * num_vals
    D = num_unary + num_vals * num_vals * num_pairs   # 32

    k_q, k_w, k_bias = jax.random.split(key, 3)
    val = 1.0 / (D ** 0.5)
    quad_part = jax.random.uniform(k_q, (D, 1), minval=-val, maxval=val, dtype=jnp.float32)
    lin_w = jax.random.uniform(k_w, (1, D), minval=-val, maxval=val, dtype=jnp.float32)
    lin_b = jax.random.uniform(k_bias, (1,), minval=-val, maxval=val, dtype=jnp.float32)

    def reference(beliefs, pots, normalize):
        bq = beliefs.shape[0]
        beliefs = beliefs.astype(jnp.float32)
        pp = pots.astype(jnp.float32)
        if normalize:
            un = jax.nn.softmax(pp[:, :num_unary].reshape(bq, num_nodes, num_vals), axis=-1)
            pr = jax.nn.softmax(pp[:, num_unary:].reshape(bq, num_pairs, -1), axis=-1)
            pp = jnp.concatenate([un.reshape(bq, -1), pr.reshape(bq, -1)], axis=1)
        x = beliefs * pp
        quad_mat = quad_part @ quad_part.T                 # original 3-matmul math
        return (-jnp.einsum("bd,de,be->b", x, quad_mat, x)
                + (x @ lin_w.T + lin_b).reshape(bq))

    checks = [
        # (B, dtype, normalize, atol, rtol)
        (8,    jnp.float32,  False, 1e-4, 1e-3),   # small, lane-packed, single tile
        (8,    jnp.float32,  True,  1e-4, 1e-3),   # fused segmented softmax
        (1000, jnp.float32,  True,  1e-3, 1e-3),   # multi-tile + ragged last block
        (8,    jnp.bfloat16, False, 1e-3, 1e-2),   # bf16 streamed, upcast in-kernel
    ]
    for (B, dt, normalize, atol, rtol) in checks:
        kb, kp = jax.random.split(jax.random.fold_in(key, B + int(normalize)), 2)
        beliefs = jax.random.normal(kb, (B, D), dtype=jnp.float32).astype(dt)
        pots = jax.random.normal(kp, (B, D), dtype=jnp.float32).astype(dt)
        out = t_model_v3_forward(
            beliefs, pots, quad_part, lin_w, lin_b,
            num_nodes=num_nodes, num_vals=num_vals, num_pairs=num_pairs,
            normalize_pots=normalize)
        out = jax.block_until_ready(out)
        ref = reference(beliefs, pots, normalize)
        assert out.shape == (B,), (B, out.shape)
        assert jnp.allclose(out, ref, atol=atol, rtol=rtol), (B, dt, normalize, out, ref)

    print("KERNEL_OK")
</pallas_src>

<mosaic_0001>
module attributes {stable_mosaic.version = 11 : i64} {
  func.func @kernel_plain(%arg0: i32, %arg1: memref<2x128xf32, #tpu.memory_space<vmem>>, %arg2: memref<2x128xf32, #tpu.memory_space<vmem>>, %arg3: memref<128x8xf32, #tpu.memory_space<vmem>>, %arg4: memref<1xf32, #tpu.memory_space<smem>>, %arg5: memref<2x4xf32, #tpu.memory_space<vmem>>) attributes {dimension_semantics = [#tpu.dimension_semantics<parallel>], iteration_bounds = array<i64: 1>, scalar_prefetch = 0 : i64, scratch_operands = 0 : i64, tpu.core_type = #tpu.core_type<tc>, window_params = [{transform_indices = @transform_0, window_bounds = array<i64: 2, 128>}, {transform_indices = @transform_1, window_bounds = array<i64: 2, 128>}, {pipeline_mode = #tpu.pipeline_mode<synchronous>, transform_indices = @transform_2, window_bounds = array<i64: 128, 8>}, {transform_indices = @transform_3, window_bounds = array<i64: 1>}, {transform_indices = @transform_4, window_bounds = array<i64: 2, 4>}]} {
    %c0 = arith.constant 0 : index
    %c0_0 = arith.constant 0 : index
    %0 = vector.load %arg1[%c0, %c0_0] : memref<2x128xf32, #tpu.memory_space<vmem>>, vector<2x128xf32>
    %c0_1 = arith.constant 0 : index
    %c0_2 = arith.constant 0 : index
    %1 = vector.load %arg2[%c0_1, %c0_2] : memref<2x128xf32, #tpu.memory_space<vmem>>, vector<2x128xf32>
    %2 = arith.mulf %0, %1 : vector<2x128xf32>
    %c0_3 = arith.constant 0 : index
    %c0_4 = arith.constant 0 : index
    %3 = vector.load %arg3[%c0_3, %c0_4] : memref<128x8xf32, #tpu.memory_space<vmem>>, vector<128x8xf32>
    %cst = arith.constant dense<0.000000e+00> : vector<2x8xf32>
    %4 = tpu.matmul %2, %3, %cst {dimension_numbers = #tpu.dot_dimension_numbers<[1], [0], [0], [1], [0, 0, 1, 1], [], []>} : vector<2x128xf32>, vector<128x8xf32>, vector<2x8xf32> -> vector<2x8xf32>
    %5 = vector.extract_strided_slice %4 {offsets = [0, 0], sizes = [2, 4], strides = [1, 1]} : vector<2x8xf32> to vector<2x4xf32>
    %6 = arith.mulf %5, %5 : vector<2x4xf32>
    %cst_5 = arith.constant 0.000000e+00 : f32
    %7 = vector.broadcast %cst_5 : f32 to vector<2x4xf32>
    %8 = arith.subf %7, %6 : vector<2x4xf32>
    %9 = vector.extract_strided_slice %4 {offsets = [0, 4], sizes = [2, 4], strides = [1, 1]} : vector<2x8xf32> to vector<2x4xf32>
    %10 = arith.addf %8, %9 : vector<2x4xf32>
    %c0_6 = arith.constant 0 : index
    %11 = memref.load %arg4[%c0_6] : memref<1xf32, #tpu.memory_space<smem>>
    %12 = vector.broadcast %11 : f32 to vector<2x4xf32>
    %13 = arith.addf %10, %12 : vector<2x4xf32>
    %c0_7 = arith.constant 0 : index
    %c0_8 = arith.constant 0 : index
    %14 = vector.load %arg5[%c0_7, %c0_8] : memref<2x4xf32, #tpu.memory_space<vmem>>, vector<2x4xf32>
    tpu.vector_store %arg5[%c0_7, %c0_8], %13 {strides = array<i32>} : memref<2x4xf32, #tpu.memory_space<vmem>>, vector<2x4xf32>,
    return
  }
  func.func @transform_0(%arg0: i32) -> (i32, i32) {
    %c0_i32 = arith.constant 0 : i32
    %c0_i32_0 = arith.constant 0 : i32
    return %arg0, %c0_i32 : i32, i32
  }
  func.func @transform_1(%arg0: i32) -> (i32, i32) {
    %c0_i32 = arith.constant 0 : i32
    %c0_i32_0 = arith.constant 0 : i32
    return %arg0, %c0_i32 : i32, i32
  }
  func.func @transform_2(%arg0: i32) -> (i32, i32) {
    %c0_i32 = arith.constant 0 : i32
    %c0_i32_0 = arith.constant 0 : i32
    %c0_i32_1 = arith.constant 0 : i32
    return %c0_i32, %c0_i32_0 : i32, i32
  }
  func.func @transform_3(%arg0: i32) -> i32 {
    %c0_i32 = arith.constant 0 : i32
    %c0_i32_0 = arith.constant 0 : i32
    return %c0_i32 : i32
  }
  func.func @transform_4(%arg0: i32) -> (i32, i32) {
    %c0_i32 = arith.constant 0 : i32
    %c0_i32_0 = arith.constant 0 : i32
    return %arg0, %c0_i32 : i32, i32
  }
}

</mosaic_0001>

<llo_original>
// kernel: tpu_custom_call.1
$region0: #{tpu_custom_call.1}
  #allocation0 [shape = 'u32[]', space=smem, size = 0x4, offset = 0x4, fixed_abs, tag = 'smem constant byte address 0x4 - core index']
  #allocation1 [shape = 'u32[72,128]{1,0:T(1,128)}', space=vmem, size = 0x9000, scoped, tag = 'internal scratch']
  #allocation2 [shape = 'f32[1]{0:T(128)S(6)}', space=smem, size = 0x200, scoped, tag = 'scoped memory for tpu_custom_call.1']
  %s0 = inlined_call_operand.vmem [shape: f32[2,128], index: 0, kind: input, shape index: {}]
  %s1 = inlined_call_operand.vmem [shape: f32[2,128], index: 1, kind: input, shape index: {}]
  %s2 = inlined_call_operand.vmem [shape: f32[128,8], index: 2, kind: input, shape index: {}]
  %s3 = inlined_call_operand.<no memory space> [shape: f32[1], index: 3, kind: input, shape index: {}]
  %s4 = inlined_call_operand.hbm [shape: f32[2,4], index: 4, kind: output, shape index: {}]
  %s5 = sld [smem:[#allocation0]]
  $region26: #{tpu_custom_call.1} parent=0
    _
  %s7 = ssub.s32 1, %s5
  %s8 = scalar_select 0, %s7, %s5
  %9 = sst [smem:[#allocation2]] %s3
  $region1: #{tpu_custom_call.1} parent=0
    #allocation3 [shape = 'u8[1024]{0}', space=vmem, size = 0x400, scoped, tag = 'output window, operand 0, single buffered']
    #allocation4 [shape = 's32[1]{0}', space=sflag, size = 0x4, scoped, tag = 'scoped memory for tpu_custom_call.1']
    %10 = vsyncpa [#allocation4], 0
    // Predicated region
    $region2: #{tpu_custom_call.1} parent=1 // pred_check
      _
    $region3: #{tpu_custom_call.1} parent=1 // pred_check_branch
      %12 = sbr.rel (0) target = $region5
    $region4: #{tpu_custom_call.1} parent=1 // pred_region
      _
    $region5: #{tpu_custom_call.1} parent=1 // pred_fallthru
      _
    // Predicated region
    $region6: #{tpu_custom_call.1} parent=1 // pred_check
      _
    $region7: #{tpu_custom_call.1} parent=1 // pred_check_branch
      %14 = sbr.rel (0) target = $region9
    $region8: #{tpu_custom_call.1} parent=1 // pred_region
      _
    $region9: #{tpu_custom_call.1} parent=1 // pred_fallthru
      _
    // Predicated region
    $region10: #{tpu_custom_call.1} parent=1 // pred_check
      _
    $region11: #{tpu_custom_call.1} parent=1 // pred_check_branch
      %16 = sbr.rel (0) target = $region13
    $region12: #{tpu_custom_call.1} parent=1 // pred_region
      _
    $region13: #{tpu_custom_call.1} parent=1 // pred_fallthru
      _
    // Predicated region
    $region14: #{tpu_custom_call.1} parent=1 // pred_check
      _
    $region15: #{tpu_custom_call.1} parent=1 // pred_check_branch
      %18 = sbr.rel (0) target = $region17
    $region16: #{tpu_custom_call.1} parent=1 // pred_region
      _
    $region17: #{tpu_custom_call.1} parent=1 // pred_fallthru
      _
    %v19 = vld [vmem:[%s0] sm:$0x3]
    %v20 = vld [vmem:[%s1] sm:$0x3]
    %v21 = vmul.f32 %v19, %v20
    %v22 = vld [vmem:[%s2] sm:$0xff]
    %v23 = vld [vmem:[%s2 + $0x8] sm:$0xff]
    %v24 = vld [vmem:[%s2 + $0x10] sm:$0xff]
    %v25 = vld [vmem:[%s2 + $0x18] sm:$0xff]
    %v26 = vld [vmem:[%s2 + $0x20] sm:$0xff]
    %v27 = vld [vmem:[%s2 + $0x28] sm:$0xff]
    %v28 = vld [vmem:[%s2 + $0x30] sm:$0xff]
    %v29 = vld [vmem:[%s2 + $0x38] sm:$0xff]
    %v30 = vld [vmem:[%s2 + $0x40] sm:$0xff]
    %v31 = vld [vmem:[%s2 + $0x48] sm:$0xff]
    %v32 = vld [vmem:[%s2 + $0x50] sm:$0xff]
    %v33 = vld [vmem:[%s2 + $0x58] sm:$0xff]
    %v34 = vld [vmem:[%s2 + $0x60] sm:$0xff]
    %v35 = vld [vmem:[%s2 + $0x68] sm:$0xff]
    %v36 = vld [vmem:[%s2 + $0x70] sm:$0xff]
    %v37 = vld [vmem:[%s2 + $0x78] sm:$0xff]
    %38 = vmatpush.msra.mxu0 %v37
    %39 = vmatpush.msra.mxu0 %v36
    %40 = vmatpush.msra.mxu0 %v35
    %41 = vmatpush.msra.mxu0 %v34
    %42 = vmatpush.msra.mxu0 %v33
    %43 = vmatpush.msra.mxu0 %v32
    %44 = vmatpush.msra.mxu0 %v31
    %45 = vmatpush.msra.mxu0 %v30
    %46 = vmatpush.msra.mxu0 %v29
    %47 = vmatpush.msra.mxu0 %v28
    %48 = vmatpush.msra.mxu0 %v27
    %49 = vmatpush.msra.mxu0 %v26
    %50 = vmatpush.msra.mxu0 %v25
    %51 = vmatpush.msra.mxu0 %v24
    %52 = vmatpush.msra.mxu0 %v23
    %53 = vmatpush.msra.mxu0 %v22
    %54 = vmatmul.f32.gmra.mxu0 %v21
    %v55 = vpop.f32.mrf.mxu0
    %v56 = vadd.f32 0.0, %v55
    %57 = vdwg.mxu0
    %v58 = vmul.f32 %v56, %v56
    %v59 = vsub.f32 0.0, %v58
    %61 = vrot.lane.b32.xlu0 %v56, 124
    %v62 = vpop.permute.xlu0 %61
    %v64 = vadd.f32 %v59, %v62
    %s65 = sld [smem:[#allocation2]]
    %v66 = vstv %s65
    %v67 = vadd.f32 %v64, %v66
    %vm68 = vcmask 25600
    %69 = vst.msk [vmem:[#allocation3] sm:$0x3] %vm68, %v67
    // Predicated region
    $region18: #{tpu_custom_call.1} parent=1 // pred_check
      _
    $region19: #{tpu_custom_call.1} parent=1 // pred_check_branch
      %71 = sbr.rel (0) target = $region21
    $region20: #{tpu_custom_call.1} parent=1 // pred_region
      %73 = vsyncadd [#allocation4], 0
      %s75 = sshll.u32 [#allocation3], 4
      %s76 = int_to_ptr.vmem [resolvable:$true] %s75
      %s77 = sshll.u32 %s4, 4
      %s78 = int_to_ptr.hbm [resolvable:$true] %s77
      %80 = dma.vmem_to_hbm [thread:$0]  %s76, 32, %s78, [#allocation4]
    $region21: #{tpu_custom_call.1} parent=1 // pred_fallthru
      _
    // Predicated region
    $region22: #{tpu_custom_call.1} parent=1 // pred_check
      _
    $region23: #{tpu_custom_call.1} parent=1 // pred_check_branch
      %82 = sbr.rel (0) target = $region25
    $region24: #{tpu_custom_call.1} parent=1 // pred_region
      %84 = dma.done [#allocation4], 32
    $region25: #{tpu_custom_call.1} parent=1 // pred_fallthru
      _
    %85 = vsyncpa [#allocation4], 1

</llo_original>
